<compile_context>
chip_gen: v5e
topology: v5e:2x2
jax: 0.10.0
libtpu: 0.0.40
codegen_flags: <defaults>
</compile_context>

<pallas_src>
import functools
import math

import jax
import jax.numpy as jnp
from jax.experimental import pallas as pl
from jax.experimental.pallas import tpu as pltpu

EPS = 1e-5                       # torch.nn.LayerNorm default
_VMEM_LIMIT = 48 * 1024 * 1024   # leaves headroom even on v7x's 64 MiB VMEM


# ---------------------------------------------------------------------------
# Kernels
# ---------------------------------------------------------------------------
def _attn_add_ln_kernel(x_ref, wqkv_ref, bqkv_ref, wo_ref, bo_ref,
                        g_ref, b_ref,
                        x1_ref, kcache_ref, vcache_ref,
                        *, num_heads, head_dim, compute_dtype):
    """Fused self-attention + residual + post-LayerNorm for one batch element.

    x_ref: (T, D).  wqkv is (D, 3D) with the 1/sqrt(head_dim) scale already
    folded into the Q slice.  Attention runs head-by-head so the live score
    block is only (T, T).
    """
    x_f32 = x_ref[...].astype(jnp.float32)            # residual kept in f32
    T, D = x_f32.shape
    xc = x_f32.astype(compute_dtype)

    # Fused QKV projection (one wide MXU matmul), f32 accumulation.
    qkv = jnp.dot(xc, wqkv_ref[...], preferred_element_type=jnp.float32)
    qkv = qkv + bqkv_ref[...].astype(jnp.float32)      # (T, 3D)
    q = qkv[:, :D]
    k = qkv[:, D:2 * D]
    v = qkv[:, 2 * D:]

    # Lane-dense K/V cache writes (D last, unmasked full-width stores).  The
    # (B, H, T, hd) layer_state layout is produced in the XLA wrapper.
    kcache_ref[...] = k.astype(kcache_ref.dtype)
    vcache_ref[...] = v.astype(vcache_ref.dtype)

    # Causal mask built in-kernel (no (T, T) HBM input / DMA).  Use a large
    # finite negative instead of finfo.min to avoid -inf/NaN risk.
    row = jax.lax.broadcasted_iota(jnp.int32, (T, T), 0)
    col = jax.lax.broadcasted_iota(jnp.int32, (T, T), 1)
    neg_bias = jnp.where(col > row, jnp.float32(-1e30), jnp.float32(0.0))

    qc = q.astype(compute_dtype)
    kc = k.astype(compute_dtype)
    vc = v.astype(compute_dtype)
    wo = wo_ref[...]

    # Per-head loop: caps live scores to (T, T) and accumulates the output
    # projection head-by-head (exact block partition of wo along its rows).
    # TODO(synk): for very long sequences, switch the inner loop to
    # flash-style KV-block tiling with online softmax.
    acc = jnp.zeros((T, D), jnp.float32)
    for h in range(num_heads):
        lo = h * head_dim
        hi = lo + head_dim
        s = jax.lax.dot_general(qc[:, lo:hi], kc[:, lo:hi],
                                (((1,), (1,)), ((), ())),
                                preferred_element_type=jnp.float32)   # (T, T)
        s = s + neg_bias
        s = s - jnp.max(s, axis=-1, keepdims=True)
        p = jnp.exp(s)
        p = p * pl.reciprocal(jnp.sum(p, axis=-1, keepdims=True), approx=True)
        ctx = jnp.dot(p.astype(compute_dtype), vc[:, lo:hi],
                      preferred_element_type=jnp.float32)             # (T, hd)
        acc = acc + jnp.dot(ctx.astype(compute_dtype), wo[lo:hi, :],
                            preferred_element_type=jnp.float32)       # (T, D)

    attn = acc + bo_ref[...].astype(jnp.float32)

    # Fused residual add + self_attn_layer_norm (post-norm), f32 statistics.
    y = x_f32 + attn
    mu = jnp.mean(y, axis=-1, keepdims=True)
    var = jnp.mean(jnp.square(y - mu), axis=-1, keepdims=True)
    yn = (y - mu) * jax.lax.rsqrt(var + EPS)
    x1_ref[...] = (yn * g_ref[...].astype(jnp.float32)
                   + b_ref[...].astype(jnp.float32)).astype(x1_ref.dtype)


def _ffn_add_ln_kernel(x_ref, w1_ref, b1_ref, w2_ref, b2_ref,
                       g_ref, b_ref, o_ref, *, compute_dtype):
    """out = LayerNorm(x + fc2(gelu(fc1(x)))) on one (tile_rows, D) tile."""
    x_f32 = x_ref[...].astype(jnp.float32)
    xc = x_f32.astype(compute_dtype)
    h = jnp.dot(xc, w1_ref[...], preferred_element_type=jnp.float32)
    h = h + b1_ref[...].astype(jnp.float32)
    h = jax.nn.gelu(h, approximate=False)              # exact erf gelu == F.gelu
    h = jnp.dot(h.astype(compute_dtype), w2_ref[...],
                preferred_element_type=jnp.float32)
    h = h + b2_ref[...].astype(jnp.float32)
    y = x_f32 + h
    mu = jnp.mean(y, axis=-1, keepdims=True)
    var = jnp.mean(jnp.square(y - mu), axis=-1, keepdims=True)
    yn = (y - mu) * jax.lax.rsqrt(var + EPS)
    o_ref[...] = (yn * g_ref[...].astype(jnp.float32)
                  + b_ref[...].astype(jnp.float32)).astype(o_ref.dtype)


# ---------------------------------------------------------------------------
# Wrappers
# ---------------------------------------------------------------------------
def _attn_block_call(x_btd, p_attn, ln_g, ln_b, num_heads, compute_dtype):
    B, T, D = x_btd.shape
    head_dim = D // num_heads
    scale = head_dim ** -0.5

    # Fuse Q/K/V weights into one (D, 3D) matrix; fold the scale into Q.
    wqkv = jnp.concatenate(
        [p_attn['wq'] * scale, p_attn['wk'], p_attn['wv']], axis=1
    ).astype(compute_dtype)
    bqkv = jnp.concatenate(
        [p_attn['bq'] * scale, p_attn['bk'], p_attn['bv']], axis=1)
    wo = p_attn['wo'].astype(compute_dtype)

    kernel = functools.partial(_attn_add_ln_kernel, num_heads=num_heads,
                               head_dim=head_dim, compute_dtype=compute_dtype)
    batch_spec = pl.BlockSpec((None, T, D), lambda b: (b, 0, 0))
    const = lambda shape: pl.BlockSpec(shape, lambda b: (0, 0))

    return pl.pallas_call(
        kernel,
        grid=(B,),
        in_specs=[
            batch_spec,                                  # x (per batch)
            const((D, 3 * D)), const((1, 3 * D)),        # fused qkv proj
            const((D, D)), const((1, D)),                # out_proj
            const((1, D)), const((1, D)),                # self_attn_layer_norm
        ],
        out_specs=(batch_spec, batch_spec, batch_spec),
        out_shape=(
            jax.ShapeDtypeStruct((B, T, D), x_btd.dtype),   # x1 = LN(x + attn)
            jax.ShapeDtypeStruct((B, T, D), x_btd.dtype),   # k cache (lane-dense)
            jax.ShapeDtypeStruct((B, T, D), x_btd.dtype),   # v cache (lane-dense)
        ),
        compiler_params=pltpu.CompilerParams(
            dimension_semantics=("parallel",),
            vmem_limit_bytes=_VMEM_LIMIT),
    )(x_btd, wqkv, bqkv, wo, p_attn['bo'], ln_g, ln_b)


def _row_tile(n_rows, max_tile):
    t = min(n_rows, max_tile)
    while n_rows % t:
        t -= 1
    return t


def _ffn_block_call(x1_btd, params, compute_dtype, max_row_tile=256):
    # max_row_tile=256 keeps the per-tile f32 gelu intermediate small enough
    # for v7x's 64 MiB VMEM; on v5e/v6e larger tiles would also fit.
    B, T, D = x1_btd.shape
    F_dim = params['w1'].shape[1]
    n_rows = B * T
    rows = x1_btd.reshape(n_rows, D)
    tile = _row_tile(n_rows, max_row_tile)

    kernel = functools.partial(_ffn_add_ln_kernel, compute_dtype=compute_dtype)
    const = lambda shape: pl.BlockSpec(shape, lambda i: (0, 0))

    out = pl.pallas_call(
        kernel,
        grid=(n_rows // tile,),
        in_specs=[
            pl.BlockSpec((tile, D), lambda i: (i, 0)),   # activation row tile
            const((D, F_dim)), const((1, F_dim)),        # fc1 (constant map ->
            const((F_dim, D)), const((1, D)),            #  DMA'd once, kept)
            const((1, D)), const((1, D)),                # final_layer_norm
        ],
        out_specs=pl.BlockSpec((tile, D), lambda i: (i, 0)),
        out_shape=jax.ShapeDtypeStruct((n_rows, D), x1_btd.dtype),
        compiler_params=pltpu.CompilerParams(
            dimension_semantics=("parallel",),
            vmem_limit_bytes=_VMEM_LIMIT),
    )(rows,
      params['w1'].astype(compute_dtype), params['b1'],
      params['w2'].astype(compute_dtype), params['b2'],
      params['ln3_g'], params['ln3_b'])
    return out.reshape(B, T, D)


def decoder_layer_lm_forward_btd(x_btd, params, num_heads, layer_state=None,
                                 compute_dtype=jnp.float32):
    """Batch-major core: (B, T, D) -> (B, T, D)."""
    if layer_state is None:
        layer_state = {}
    B, T, D = x_btd.shape
    head_dim = D // num_heads

    x1, k_cache, v_cache = _attn_block_call(
        x_btd, params['self_attn'], params['ln1_g'], params['ln1_b'],
        num_heads, compute_dtype)

    # layer_state follows PyTorch's (bsz, num_heads, seq, head_dim) layout; the
    # kernel wrote lane-dense (B, T, D), the transpose happens here in XLA.
    layer_state['self'] = {
        'prev_key': k_cache.reshape(B, T, num_heads, head_dim)
                           .transpose(0, 2, 1, 3),
        'prev_value': v_cache.reshape(B, T, num_heads, head_dim)
                             .transpose(0, 2, 1, 3),
        'prev_key_padding_mask': None,
    }

    # encoder_hidden_states is None -> cross-attention block skipped entirely.
    # TODO(synk): encoder_attn (cross-attention) branch not exercised on the
    # LM path; its params exist in the module but are unused here.
    x2 = _ffn_block_call(x1, params, compute_dtype)

    self_attn_weights = None      # output_attentions=False
    return x2, self_attn_weights, layer_state


def decoder_layer_lm_forward(x_tbd, params, causal_mask, num_heads,
                             layer_state=None, compute_dtype=jnp.float32):
    """DecoderLayerLM.forward(x, encoder_hidden_states=None, causal_mask=...)
    in eval mode with normalize_before=False.  x_tbd: (T, B, D)."""
    # TODO(synk): the kernel builds the standard causal mask in-kernel;
    # arbitrary attn_mask / decoder_padding_mask values are not supported on
    # this LM fast path.
    del causal_mask
    x_btd = jnp.transpose(x_tbd, (1, 0, 2))
    # TODO(synk): when stacking layers, call decoder_layer_lm_forward_btd
    # directly and transpose only once outside the stack.
    out_btd, attn_w, layer_state = decoder_layer_lm_forward_btd(
        x_btd, params, num_heads, layer_state, compute_dtype)
    return jnp.transpose(out_btd, (1, 0, 2)), attn_w, layer_state


# ---------------------------------------------------------------------------
# Deterministic parameter construction + pure-JAX reference
# ---------------------------------------------------------------------------
def _init_linear(key, in_dim, out_dim):
    """nn.Linear-style init; weight stored pre-transposed as (in, out)."""
    k1, k2 = jax.random.split(key)
    bound = 1.0 / math.sqrt(in_dim)
    w = jax.random.uniform(k1, (in_dim, out_dim), jnp.float32, -bound, bound)
    b = jax.random.uniform(k2, (1, out_dim), jnp.float32, -bound, bound)
    return w, b


def make_params(key, d_model, ffn_dim):
    ks = jax.random.split(key, 16)
    wq, bq = _init_linear(ks[0], d_model, d_model)
    wk, bk = _init_linear(ks[1], d_model, d_model)
    wv, bv = _init_linear(ks[2], d_model, d_model)
    wo, bo = _init_linear(ks[3], d_model, d_model)
    w1, b1 = _init_linear(ks[4], d_model, ffn_dim)
    w2, b2 = _init_linear(ks[5], ffn_dim, d_model)
    # encoder_attn params exist in the module but are unused on the LM path.
    _ = [_init_linear(ks[6 + i], d_model, d_model) for i in range(4)]
    ones = jnp.ones((1, d_model), jnp.float32)
    zeros = jnp.zeros((1, d_model), jnp.float32)
    return {
        'self_attn': dict(wq=wq, bq=bq, wk=wk, bk=bk, wv=wv, bv=bv,
                          wo=wo, bo=bo),
        'ln1_g': ones, 'ln1_b': zeros,       # self_attn_layer_norm
        'ln2_g': ones, 'ln2_b': zeros,       # encoder_attn_layer_norm (unused)
        'ln3_g': ones, 'ln3_b': zeros,       # final_layer_norm
        'w1': w1, 'b1': b1, 'w2': w2, 'b2': b2,
    }


def reference_forward(x_tbd, params, mask, num_heads):
    T, B, D = x_tbd.shape
    hd = D // num_heads
    p = params['self_attn']
    x = jnp.transpose(x_tbd, (1, 0, 2))
    q = (x @ p['wq'] + p['bq']) * (hd ** -0.5)
    k = x @ p['wk'] + p['bk']
    v = x @ p['wv'] + p['bv']
    qh = q.reshape(B, T, num_heads, hd)
    kh = k.reshape(B, T, num_heads, hd)
    vh = v.reshape(B, T, num_heads, hd)
    s = jnp.einsum('bthd,bshd->bhts', qh, kh) + mask[None, None]
    a = jax.nn.softmax(s, axis=-1)
    ctx = jnp.einsum('bhts,bshd->bthd', a, vh).reshape(B, T, D)
    attn_out = ctx @ p['wo'] + p['bo']

    def ln(y, g, b):
        mu = y.mean(-1, keepdims=True)
        var = ((y - mu) ** 2).mean(-1, keepdims=True)
        return (y - mu) / jnp.sqrt(var + EPS) * g + b

    x1 = ln(x + attn_out, params['ln1_g'], params['ln1_b'])
    h = jax.nn.gelu(x1 @ params['w1'] + params['b1'], approximate=False)
    h = h @ params['w2'] + params['b2']
    x2 = ln(x1 + h, params['ln3_g'], params['ln3_b'])
    ref_k = jnp.transpose(kh, (0, 2, 1, 3))
    return jnp.transpose(x2, (1, 0, 2)), ref_k


# ---------------------------------------------------------------------------
if __name__ == "__main__":
    T, B, D = 8, 2, 32          # seq, batch, d_model
    NUM_HEADS = 4
    FFN_DIM = 64

    root = jax.random.PRNGKey(0)
    k_x, k_p = jax.random.split(root)
    x = jax.random.normal(k_x, (T, B, D), jnp.float32)      # (T, B, D)
    params = make_params(k_p, D, FFN_DIM)

    neg = jnp.finfo(jnp.float32).min
    i = jnp.arange(T)[:, None]
    j = jnp.arange(T)[None, :]
    causal_mask = jnp.where(j > i, neg, 0.0).astype(jnp.float32)  # (T, T)

    ref, ref_k = reference_forward(x, params, causal_mask, NUM_HEADS)

    # f32 compute path: tight tolerance vs the pure-JAX reference.
    out, attn_w, layer_state = decoder_layer_lm_forward(
        x, params, causal_mask, NUM_HEADS, compute_dtype=jnp.float32)
    out = jax.block_until_ready(out)
    assert out.shape == (T, B, D)
    assert attn_w is None
    assert layer_state['self']['prev_key'].shape == (B, NUM_HEADS, T,
                                                     D // NUM_HEADS)
    assert jnp.max(jnp.abs(out - ref)) < 2e-3, "f32 mismatch vs reference"
    assert jnp.max(jnp.abs(layer_state['self']['prev_key'] - ref_k)) < 1e-4, \
        "K-cache mismatch vs reference"

    # bf16-MXU compute path (f32 accumulation + f32 softmax/LN): looser tol.
    out_bf16, _, _ = decoder_layer_lm_forward(
        x, params, causal_mask, NUM_HEADS, compute_dtype=jnp.bfloat16)
    out_bf16 = jax.block_until_ready(out_bf16)
    assert jnp.max(jnp.abs(out_bf16 - ref)) < 5e-2, "bf16 mismatch vs reference"

    print("KERNEL_OK")
</pallas_src>

<mosaic_0001>
module attributes {stable_mosaic.version = 11 : i64} {
  func.func @_attn_add_ln_kernel(%arg0: i32, %arg1: memref<1x8x32xf32, #tpu.memory_space<vmem>>, %arg2: memref<32x96xf32, #tpu.memory_space<vmem>>, %arg3: memref<1x96xf32, #tpu.memory_space<vmem>>, %arg4: memref<32x32xf32, #tpu.memory_space<vmem>>, %arg5: memref<1x32xf32, #tpu.memory_space<vmem>>, %arg6: memref<1x32xf32, #tpu.memory_space<vmem>>, %arg7: memref<1x32xf32, #tpu.memory_space<vmem>>, %arg8: memref<1x8x32xf32, #tpu.memory_space<vmem>>, %arg9: memref<1x8x32xf32, #tpu.memory_space<vmem>>, %arg10: memref<1x8x32xf32, #tpu.memory_space<vmem>>) attributes {dimension_semantics = [#tpu.dimension_semantics<parallel>], iteration_bounds = array<i64: 2>, scalar_prefetch = 0 : i64, scratch_operands = 0 : i64, tpu.core_type = #tpu.core_type<tc>, window_params = [{transform_indices = @transform_0, window_bounds = array<i64: 1, 8, 32>}, {pipeline_mode = #tpu.pipeline_mode<synchronous>, transform_indices = @transform_1, window_bounds = array<i64: 32, 96>}, {pipeline_mode = #tpu.pipeline_mode<synchronous>, transform_indices = @transform_2, window_bounds = array<i64: 1, 96>}, {pipeline_mode = #tpu.pipeline_mode<synchronous>, transform_indices = @transform_3, window_bounds = array<i64: 32, 32>}, {pipeline_mode = #tpu.pipeline_mode<synchronous>, transform_indices = @transform_4, window_bounds = array<i64: 1, 32>}, {pipeline_mode = #tpu.pipeline_mode<synchronous>, transform_indices = @transform_5, window_bounds = array<i64: 1, 32>}, {pipeline_mode = #tpu.pipeline_mode<synchronous>, transform_indices = @transform_6, window_bounds = array<i64: 1, 32>}, {transform_indices = @transform_7, window_bounds = array<i64: 1, 8, 32>}, {transform_indices = @transform_8, window_bounds = array<i64: 1, 8, 32>}, {transform_indices = @transform_9, window_bounds = array<i64: 1, 8, 32>}]} {
    %c0 = arith.constant 0 : index
    %c0_0 = arith.constant 0 : index
    %c0_1 = arith.constant 0 : index
    %0 = vector.load %arg1[%c0, %c0_0, %c0_1] : memref<1x8x32xf32, #tpu.memory_space<vmem>>, vector<1x8x32xf32>
    %1 = vector.shape_cast %0 : vector<1x8x32xf32> to vector<8x32xf32>
    %c0_2 = arith.constant 0 : index
    %c0_3 = arith.constant 0 : index
    %2 = vector.load %arg2[%c0_2, %c0_3] : memref<32x96xf32, #tpu.memory_space<vmem>>, vector<32x96xf32>
    %cst = arith.constant dense<0.000000e+00> : vector<8x96xf32>
    %3 = tpu.matmul %1, %2, %cst {dimension_numbers = #tpu.dot_dimension_numbers<[1], [0], [0], [1], [0, 0, 1, 1], [], []>} : vector<8x32xf32>, vector<32x96xf32>, vector<8x96xf32> -> vector<8x96xf32>
    %c0_4 = arith.constant 0 : index
    %c0_5 = arith.constant 0 : index
    %4 = vector.load %arg3[%c0_4, %c0_5] : memref<1x96xf32, #tpu.memory_space<vmem>>, vector<1x96xf32>
    %5 = vector.broadcast %4 : vector<1x96xf32> to vector<8x96xf32>
    %6 = arith.addf %3, %5 : vector<8x96xf32>
    %7 = vector.extract_strided_slice %6 {offsets = [0, 0], sizes = [8, 32], strides = [1, 1]} : vector<8x96xf32> to vector<8x32xf32>
    %8 = vector.extract_strided_slice %6 {offsets = [0, 32], sizes = [8, 32], strides = [1, 1]} : vector<8x96xf32> to vector<8x32xf32>
    %9 = vector.extract_strided_slice %6 {offsets = [0, 64], sizes = [8, 32], strides = [1, 1]} : vector<8x96xf32> to vector<8x32xf32>
    %c0_6 = arith.constant 0 : index
    %c0_7 = arith.constant 0 : index
    %c0_8 = arith.constant 0 : index
    %10 = vector.load %arg9[%c0_6, %c0_7, %c0_8] : memref<1x8x32xf32, #tpu.memory_space<vmem>>, vector<1x8x32xf32>
    %11 = vector.shape_cast %10 : vector<1x8x32xf32> to vector<8x32xf32>
    %12 = vector.shape_cast %8 : vector<8x32xf32> to vector<1x8x32xf32>
    tpu.vector_store %arg9[%c0_6, %c0_7, %c0_8], %12 {strides = array<i32>} : memref<1x8x32xf32, #tpu.memory_space<vmem>>, vector<1x8x32xf32>,
    %c0_9 = arith.constant 0 : index
    %c0_10 = arith.constant 0 : index
    %c0_11 = arith.constant 0 : index
    %13 = vector.load %arg10[%c0_9, %c0_10, %c0_11] : memref<1x8x32xf32, #tpu.memory_space<vmem>>, vector<1x8x32xf32>
    %14 = vector.shape_cast %13 : vector<1x8x32xf32> to vector<8x32xf32>
    %15 = vector.shape_cast %9 : vector<8x32xf32> to vector<1x8x32xf32>
    tpu.vector_store %arg10[%c0_9, %c0_10, %c0_11], %15 {strides = array<i32>} : memref<1x8x32xf32, #tpu.memory_space<vmem>>, vector<1x8x32xf32>,
    %16 = tpu.iota {dimensions = array<i32: 0>} : vector<8x8xi32>
    %17 = tpu.iota {dimensions = array<i32: 1>} : vector<8x8xi32>
    %18 = arith.cmpi sgt, %17, %16 : vector<8x8xi32>
    %cst_12 = arith.constant -1.000000e+30 : f32
    %cst_13 = arith.constant 0.000000e+00 : f32
    %19 = vector.broadcast %cst_12 : f32 to vector<8x8xf32>
    %20 = vector.broadcast %cst_13 : f32 to vector<8x8xf32>
    %21 = arith.select %18, %19, %20 : vector<8x8xi1>, vector<8x8xf32>
    %c0_14 = arith.constant 0 : index
    %c0_15 = arith.constant 0 : index
    %22 = vector.load %arg4[%c0_14, %c0_15] : memref<32x32xf32, #tpu.memory_space<vmem>>, vector<32x32xf32>
    %cst_16 = arith.constant 0.000000e+00 : f32
    %23 = vector.broadcast %cst_16 : f32 to vector<8x32xf32>
    %24 = vector.extract_strided_slice %7 {offsets = [0, 0], sizes = [8, 8], strides = [1, 1]} : vector<8x32xf32> to vector<8x8xf32>
    %25 = vector.extract_strided_slice %8 {offsets = [0, 0], sizes = [8, 8], strides = [1, 1]} : vector<8x32xf32> to vector<8x8xf32>
    %cst_17 = arith.constant dense<0.000000e+00> : vector<8x8xf32>
    %26 = tpu.matmul %24, %25, %cst_17 {dimension_numbers = #tpu.dot_dimension_numbers<[1], [1], [0], [0], [0, 0, 1, 0], [], []>} : vector<8x8xf32>, vector<8x8xf32>, vector<8x8xf32> -> vector<8x8xf32>
    %27 = arith.addf %26, %21 : vector<8x8xf32>
    %cst_18 = arith.constant dense<0xFF800000> : vector<8xf32>
    %28 = vector.multi_reduction <maximumf>, %27, %cst_18 [1] : vector<8x8xf32> to vector<8xf32>
    %29 = vector.shape_cast %28 : vector<8xf32> to vector<8x1xf32>
    %30 = vector.broadcast %29 : vector<8x1xf32> to vector<8x8xf32>
    %31 = arith.subf %27, %30 : vector<8x8xf32>
    %32 = math.exp %31 : vector<8x8xf32>
    %cst_19 = arith.constant dense<0.000000e+00> : vector<8xf32>
    %33 = vector.multi_reduction <add>, %32, %cst_19 [1] : vector<8x8xf32> to vector<8xf32>
    %34 = vector.shape_cast %33 : vector<8xf32> to vector<8x1xf32>
    %35 = tpu.reciprocal %34 {approx = true} : vector<8x1xf32> -> vector<8x1xf32>
    %36 = vector.broadcast %35 : vector<8x1xf32> to vector<8x8xf32>
    %37 = arith.mulf %32, %36 : vector<8x8xf32>
    %38 = vector.extract_strided_slice %9 {offsets = [0, 0], sizes = [8, 8], strides = [1, 1]} : vector<8x32xf32> to vector<8x8xf32>
    %cst_20 = arith.constant dense<0.000000e+00> : vector<8x8xf32>
    %39 = tpu.matmul %37, %38, %cst_20 {dimension_numbers = #tpu.dot_dimension_numbers<[1], [0], [0], [1], [0, 0, 1, 1], [], []>} : vector<8x8xf32>, vector<8x8xf32>, vector<8x8xf32> -> vector<8x8xf32>
    %40 = vector.extract_strided_slice %22 {offsets = [0, 0], sizes = [8, 32], strides = [1, 1]} : vector<32x32xf32> to vector<8x32xf32>
    %cst_21 = arith.constant dense<0.000000e+00> : vector<8x32xf32>
    %41 = tpu.matmul %39, %40, %cst_21 {dimension_numbers = #tpu.dot_dimension_numbers<[1], [0], [0], [1], [0, 0, 1, 1], [], []>} : vector<8x8xf32>, vector<8x32xf32>, vector<8x32xf32> -> vector<8x32xf32>
    %42 = arith.addf %23, %41 : vector<8x32xf32>
    %43 = vector.extract_strided_slice %7 {offsets = [0, 8], sizes = [8, 8], strides = [1, 1]} : vector<8x32xf32> to vector<8x8xf32>
    %44 = vector.extract_strided_slice %8 {offsets = [0, 8], sizes = [8, 8], strides = [1, 1]} : vector<8x32xf32> to vector<8x8xf32>
    %cst_22 = arith.constant dense<0.000000e+00> : vector<8x8xf32>
    %45 = tpu.matmul %43, %44, %cst_22 {dimension_numbers = #tpu.dot_dimension_numbers<[1], [1], [0], [0], [0, 0, 1, 0], [], []>} : vector<8x8xf32>, vector<8x8xf32>, vector<8x8xf32> -> vector<8x8xf32>
    %46 = arith.addf %45, %21 : vector<8x8xf32>
    %cst_23 = arith.constant dense<0xFF800000> : vector<8xf32>
    %47 = vector.multi_reduction <maximumf>, %46, %cst_23 [1] : vector<8x8xf32> to vector<8xf32>
    %48 = vector.shape_cast %47 : vector<8xf32> to vector<8x1xf32>
    %49 = vector.broadcast %48 : vector<8x1xf32> to vector<8x8xf32>
    %50 = arith.subf %46, %49 : vector<8x8xf32>
    %51 = math.exp %50 : vector<8x8xf32>
    %cst_24 = arith.constant dense<0.000000e+00> : vector<8xf32>
    %52 = vector.multi_reduction <add>, %51, %cst_24 [1] : vector<8x8xf32> to vector<8xf32>
    %53 = vector.shape_cast %52 : vector<8xf32> to vector<8x1xf32>
    %54 = tpu.reciprocal %53 {approx = true} : vector<8x1xf32> -> vector<8x1xf32>
    %55 = vector.broadcast %54 : vector<8x1xf32> to vector<8x8xf32>
    %56 = arith.mulf %51, %55 : vector<8x8xf32>
    %57 = vector.extract_strided_slice %9 {offsets = [0, 8], sizes = [8, 8], strides = [1, 1]} : vector<8x32xf32> to vector<8x8xf32>
    %cst_25 = arith.constant dense<0.000000e+00> : vector<8x8xf32>
    %58 = tpu.matmul %56, %57, %cst_25 {dimension_numbers = #tpu.dot_dimension_numbers<[1], [0], [0], [1], [0, 0, 1, 1], [], []>} : vector<8x8xf32>, vector<8x8xf32>, vector<8x8xf32> -> vector<8x8xf32>
    %59 = vector.extract_strided_slice %22 {offsets = [8, 0], sizes = [8, 32], strides = [1, 1]} : vector<32x32xf32> to vector<8x32xf32>
    %cst_26 = arith.constant dense<0.000000e+00> : vector<8x32xf32>
    %60 = tpu.matmul %58, %59, %cst_26 {dimension_numbers = #tpu.dot_dimension_numbers<[1], [0], [0], [1], [0, 0, 1, 1], [], []>} : vector<8x8xf32>, vector<8x32xf32>, vector<8x32xf32> -> vector<8x32xf32>
    %61 = arith.addf %42, %60 : vector<8x32xf32>
    %62 = vector.extract_strided_slice %7 {offsets = [0, 16], sizes = [8, 8], strides = [1, 1]} : vector<8x32xf32> to vector<8x8xf32>
    %63 = vector.extract_strided_slice %8 {offsets = [0, 16], sizes = [8, 8], strides = [1, 1]} : vector<8x32xf32> to vector<8x8xf32>
    %cst_27 = arith.constant dense<0.000000e+00> : vector<8x8xf32>
    %64 = tpu.matmul %62, %63, %cst_27 {dimension_numbers = #tpu.dot_dimension_numbers<[1], [1], [0], [0], [0, 0, 1, 0], [], []>} : vector<8x8xf32>, vector<8x8xf32>, vector<8x8xf32> -> vector<8x8xf32>
    %65 = arith.addf %64, %21 : vector<8x8xf32>
    %cst_28 = arith.constant dense<0xFF800000> : vector<8xf32>
    %66 = vector.multi_reduction <maximumf>, %65, %cst_28 [1] : vector<8x8xf32> to vector<8xf32>
    %67 = vector.shape_cast %66 : vector<8xf32> to vector<8x1xf32>
    %68 = vector.broadcast %67 : vector<8x1xf32> to vector<8x8xf32>
    %69 = arith.subf %65, %68 : vector<8x8xf32>
    %70 = math.exp %69 : vector<8x8xf32>
    %cst_29 = arith.constant dense<0.000000e+00> : vector<8xf32>
    %71 = vector.multi_reduction <add>, %70, %cst_29 [1] : vector<8x8xf32> to vector<8xf32>
    %72 = vector.shape_cast %71 : vector<8xf32> to vector<8x1xf32>
    %73 = tpu.reciprocal %72 {approx = true} : vector<8x1xf32> -> vector<8x1xf32>
    %74 = vector.broadcast %73 : vector<8x1xf32> to vector<8x8xf32>
    %75 = arith.mulf %70, %74 : vector<8x8xf32>
    %76 = vector.extract_strided_slice %9 {offsets = [0, 16], sizes = [8, 8], strides = [1, 1]} : vector<8x32xf32> to vector<8x8xf32>
    %cst_30 = arith.constant dense<0.000000e+00> : vector<8x8xf32>
    %77 = tpu.matmul %75, %76, %cst_30 {dimension_numbers = #tpu.dot_dimension_numbers<[1], [0], [0], [1], [0, 0, 1, 1], [], []>} : vector<8x8xf32>, vector<8x8xf32>, vector<8x8xf32> -> vector<8x8xf32>
    %78 = vector.extract_strided_slice %22 {offsets = [16, 0], sizes = [8, 32], strides = [1, 1]} : vector<32x32xf32> to vector<8x32xf32>
    %cst_31 = arith.constant dense<0.000000e+00> : vector<8x32xf32>
    %79 = tpu.matmul %77, %78, %cst_31 {dimension_numbers = #tpu.dot_dimension_numbers<[1], [0], [0], [1], [0, 0, 1, 1], [], []>} : vector<8x8xf32>, vector<8x32xf32>, vector<8x32xf32> -> vector<8x32xf32>
    %80 = arith.addf %61, %79 : vector<8x32xf32>
    %81 = vector.extract_strided_slice %7 {offsets = [0, 24], sizes = [8, 8], strides = [1, 1]} : vector<8x32xf32> to vector<8x8xf32>
    %82 = vector.extract_strided_slice %8 {offsets = [0, 24], sizes = [8, 8], strides = [1, 1]} : vector<8x32xf32> to vector<8x8xf32>
    %cst_32 = arith.constant dense<0.000000e+00> : vector<8x8xf32>
    %83 = tpu.matmul %81, %82, %cst_32 {dimension_numbers = #tpu.dot_dimension_numbers<[1], [1], [0], [0], [0, 0, 1, 0], [], []>} : vector<8x8xf32>, vector<8x8xf32>, vector<8x8xf32> -> vector<8x8xf32>
    %84 = arith.addf %83, %21 : vector<8x8xf32>
    %cst_33 = arith.constant dense<0xFF800000> : vector<8xf32>
    %85 = vector.multi_reduction <maximumf>, %84, %cst_33 [1] : vector<8x8xf32> to vector<8xf32>
    %86 = vector.shape_cast %85 : vector<8xf32> to vector<8x1xf32>
    %87 = vector.broadcast %86 : vector<8x1xf32> to vector<8x8xf32>
    %88 = arith.subf %84, %87 : vector<8x8xf32>
    %89 = math.exp %88 : vector<8x8xf32>
    %cst_34 = arith.constant dense<0.000000e+00> : vector<8xf32>
    %90 = vector.multi_reduction <add>, %89, %cst_34 [1] : vector<8x8xf32> to vector<8xf32>
    %91 = vector.shape_cast %90 : vector<8xf32> to vector<8x1xf32>
    %92 = tpu.reciprocal %91 {approx = true} : vector<8x1xf32> -> vector<8x1xf32>
    %93 = vector.broadcast %92 : vector<8x1xf32> to vector<8x8xf32>
    %94 = arith.mulf %89, %93 : vector<8x8xf32>
    %95 = vector.extract_strided_slice %9 {offsets = [0, 24], sizes = [8, 8], strides = [1, 1]} : vector<8x32xf32> to vector<8x8xf32>
    %cst_35 = arith.constant dense<0.000000e+00> : vector<8x8xf32>
    %96 = tpu.matmul %94, %95, %cst_35 {dimension_numbers = #tpu.dot_dimension_numbers<[1], [0], [0], [1], [0, 0, 1, 1], [], []>} : vector<8x8xf32>, vector<8x8xf32>, vector<8x8xf32> -> vector<8x8xf32>
    %97 = vector.extract_strided_slice %22 {offsets = [24, 0], sizes = [8, 32], strides = [1, 1]} : vector<32x32xf32> to vector<8x32xf32>
    %cst_36 = arith.constant dense<0.000000e+00> : vector<8x32xf32>
    %98 = tpu.matmul %96, %97, %cst_36 {dimension_numbers = #tpu.dot_dimension_numbers<[1], [0], [0], [1], [0, 0, 1, 1], [], []>} : vector<8x8xf32>, vector<8x32xf32>, vector<8x32xf32> -> vector<8x32xf32>
    %99 = arith.addf %80, %98 : vector<8x32xf32>
    %c0_37 = arith.constant 0 : index
    %c0_38 = arith.constant 0 : index
    %100 = vector.load %arg5[%c0_37, %c0_38] : memref<1x32xf32, #tpu.memory_space<vmem>>, vector<1x32xf32>
    %101 = vector.broadcast %100 : vector<1x32xf32> to vector<8x32xf32>
    %102 = arith.addf %99, %101 : vector<8x32xf32>
    %103 = arith.addf %1, %102 : vector<8x32xf32>
    %cst_39 = arith.constant dense<0.000000e+00> : vector<8xf32>
    %104 = vector.multi_reduction <add>, %103, %cst_39 [1] : vector<8x32xf32> to vector<8xf32>
    %105 = vector.shape_cast %104 : vector<8xf32> to vector<8x1xf32>
    %cst_40 = arith.constant 3.200000e+01 : f32
    %106 = vector.broadcast %cst_40 : f32 to vector<8x1xf32>
    %107 = arith.divf %105, %106 : vector<8x1xf32>
    %108 = vector.broadcast %107 : vector<8x1xf32> to vector<8x32xf32>
    %109 = arith.subf %103, %108 : vector<8x32xf32>
    %110 = arith.mulf %109, %109 : vector<8x32xf32>
    %cst_41 = arith.constant dense<0.000000e+00> : vector<8xf32>
    %111 = vector.multi_reduction <add>, %110, %cst_41 [1] : vector<8x32xf32> to vector<8xf32>
    %112 = vector.shape_cast %111 : vector<8xf32> to vector<8x1xf32>
    %cst_42 = arith.constant 3.200000e+01 : f32
    %113 = vector.broadcast %cst_42 : f32 to vector<8x1xf32>
    %114 = arith.divf %112, %113 : vector<8x1xf32>
    %115 = vector.broadcast %107 : vector<8x1xf32> to vector<8x32xf32>
    %116 = arith.subf %103, %115 : vector<8x32xf32>
    %cst_43 = arith.constant 9.99999974E-6 : f32
    %117 = vector.broadcast %cst_43 : f32 to vector<8x1xf32>
    %118 = arith.addf %114, %117 : vector<8x1xf32>
    %119 = math.rsqrt %118 : vector<8x1xf32>
    %120 = vector.broadcast %119 : vector<8x1xf32> to vector<8x32xf32>
    %121 = arith.mulf %116, %120 : vector<8x32xf32>
    %c0_44 = arith.constant 0 : index
    %c0_45 = arith.constant 0 : index
    %122 = vector.load %arg6[%c0_44, %c0_45] : memref<1x32xf32, #tpu.memory_space<vmem>>, vector<1x32xf32>
    %123 = vector.broadcast %122 : vector<1x32xf32> to vector<8x32xf32>
    %124 = arith.mulf %121, %123 : vector<8x32xf32>
    %c0_46 = arith.constant 0 : index
    %c0_47 = arith.constant 0 : index
    %125 = vector.load %arg7[%c0_46, %c0_47] : memref<1x32xf32, #tpu.memory_space<vmem>>, vector<1x32xf32>
    %126 = vector.broadcast %125 : vector<1x32xf32> to vector<8x32xf32>
    %127 = arith.addf %124, %126 : vector<8x32xf32>
    %c0_48 = arith.constant 0 : index
    %c0_49 = arith.constant 0 : index
    %c0_50 = arith.constant 0 : index
    %128 = vector.load %arg8[%c0_48, %c0_49, %c0_50] : memref<1x8x32xf32, #tpu.memory_space<vmem>>, vector<1x8x32xf32>
    %129 = vector.shape_cast %128 : vector<1x8x32xf32> to vector<8x32xf32>
    %130 = vector.shape_cast %127 : vector<8x32xf32> to vector<1x8x32xf32>
    tpu.vector_store %arg8[%c0_48, %c0_49, %c0_50], %130 {strides = array<i32>} : memref<1x8x32xf32, #tpu.memory_space<vmem>>, vector<1x8x32xf32>,
    return
  }
  func.func @transform_0(%arg0: i32) -> (i32, i32, i32) {
    %c0_i32 = arith.constant 0 : i32
    %c0_i32_0 = arith.constant 0 : i32
    %c0_i32_1 = arith.constant 0 : i32
    return %arg0, %c0_i32, %c0_i32_0 : i32, i32, i32
  }
  func.func @transform_1(%arg0: i32) -> (i32, i32) {
    %c0_i32 = arith.constant 0 : i32
    %c0_i32_0 = arith.constant 0 : i32
    %c0_i32_1 = arith.constant 0 : i32
    return %c0_i32, %c0_i32_0 : i32, i32
  }
  func.func @transform_2(%arg0: i32) -> (i32, i32) {
    %c0_i32 = arith.constant 0 : i32
    %c0_i32_0 = arith.constant 0 : i32
    %c0_i32_1 = arith.constant 0 : i32
    return %c0_i32, %c0_i32_0 : i32, i32
  }
  func.func @transform_3(%arg0: i32) -> (i32, i32) {
    %c0_i32 = arith.constant 0 : i32
    %c0_i32_0 = arith.constant 0 : i32
    %c0_i32_1 = arith.constant 0 : i32
    return %c0_i32, %c0_i32_0 : i32, i32
  }
  func.func @transform_4(%arg0: i32) -> (i32, i32) {
    %c0_i32 = arith.constant 0 : i32
    %c0_i32_0 = arith.constant 0 : i32
    %c0_i32_1 = arith.constant 0 : i32
    return %c0_i32, %c0_i32_0 : i32, i32
  }
  func.func @transform_5(%arg0: i32) -> (i32, i32) {
    %c0_i32 = arith.constant 0 : i32
    %c0_i32_0 = arith.constant 0 : i32
    %c0_i32_1 = arith.constant 0 : i32
    return %c0_i32, %c0_i32_0 : i32, i32
  }
  func.func @transform_6(%arg0: i32) -> (i32, i32) {
    %c0_i32 = arith.constant 0 : i32
    %c0_i32_0 = arith.constant 0 : i32
    %c0_i32_1 = arith.constant 0 : i32
    return %c0_i32, %c0_i32_0 : i32, i32
  }
  func.func @transform_7(%arg0: i32) -> (i32, i32, i32) {
    %c0_i32 = arith.constant 0 : i32
    %c0_i32_0 = arith.constant 0 : i32
    %c0_i32_1 = arith.constant 0 : i32
    return %arg0, %c0_i32, %c0_i32_0 : i32, i32, i32
  }
  func.func @transform_8(%arg0: i32) -> (i32, i32, i32) {
    %c0_i32 = arith.constant 0 : i32
    %c0_i32_0 = arith.constant 0 : i32
    %c0_i32_1 = arith.constant 0 : i32
    return %arg0, %c0_i32, %c0_i32_0 : i32, i32, i32
  }
  func.func @transform_9(%arg0: i32) -> (i32, i32, i32) {
    %c0_i32 = arith.constant 0 : i32
    %c0_i32_0 = arith.constant 0 : i32
    %c0_i32_1 = arith.constant 0 : i32
    return %arg0, %c0_i32, %c0_i32_0 : i32, i32, i32
  }
}

</mosaic_0001>

<llo_original>
// kernel: tpu_custom_call.1
$region0: #{tpu_custom_call.1}
  #allocation0 [shape = 'u32[]', space=smem, size = 0x4, offset = 0x4, fixed_abs, tag = 'smem constant byte address 0x4 - core index']
  #allocation1 [shape = 'u32[72,128]{1,0:T(1,128)}', space=vmem, size = 0x9000, scoped, tag = 'internal scratch']
  %s0 = inlined_call_operand.hbm [shape: f32[2,8,32], index: 0, kind: input, shape index: {}]
  %s1 = inlined_call_operand.hbm [shape: f32[32,96], index: 1, kind: input, shape index: {}]
  %s2 = inlined_call_operand.vmem [shape: f32[1,96], index: 2, kind: input, shape index: {}]
  %s3 = inlined_call_operand.hbm [shape: f32[32,32], index: 3, kind: input, shape index: {}]
  %s4 = inlined_call_operand.vmem [shape: f32[1,32], index: 4, kind: input, shape index: {}]
  %s5 = inlined_call_operand.vmem [shape: f32[1,32], index: 5, kind: input, shape index: {}]
  %s6 = inlined_call_operand.vmem [shape: f32[1,32], index: 6, kind: input, shape index: {}]
  %s7 = inlined_call_operand.hbm [shape: f32[2,8,32], index: 7, kind: output, shape index: {0}]
  %s8 = inlined_call_operand.hbm [shape: f32[2,8,32], index: 8, kind: output, shape index: {1}]
  %s9 = inlined_call_operand.hbm [shape: f32[2,8,32], index: 9, kind: output, shape index: {2}]
  %10 = xla_tuple %s7, %s8, %s9
  %s11 = sld [smem:[#allocation0]]
  $region89: #{tpu_custom_call.1} parent=0
    _
  %s13 = ssub.s32 1, %s11
  %s14 = scalar_select 0, %s13, %s11
  $region1: #{tpu_custom_call.1} parent=0
    #allocation2 [shape = 'u8[8192]{0}', space=vmem, size = 0x2000, scoped, tag = 'input window, operand 0']
    #allocation3 [shape = 's32[2]{0}', space=sflag, size = 0x8, scoped, tag = 'scoped memory for tpu_custom_call.1']
    #allocation4 [shape = 's32[2]{0}', space=sflag, size = 0x8, scoped, tag = 'scoped memory for tpu_custom_call.1']
    #allocation5 [shape = 'u8[16384]{0}', space=vmem, size = 0x4000, scoped, tag = 'input window, operand 1, single buffered']
    #allocation6 [shape = 's32[1]{0}', space=sflag, size = 0x4, scoped, tag = 'scoped memory for tpu_custom_call.1']
    #allocation7 [shape = 'u8[16384]{0}', space=vmem, size = 0x4000, scoped, tag = 'input window, operand 3, single buffered']
    #allocation8 [shape = 'u8[8192]{0}', space=vmem, size = 0x2000, scoped, tag = 'output window, operand 0']
    #allocation9 [shape = 'u8[8192]{0}', space=vmem, size = 0x2000, scoped, tag = 'output window, operand 1']
    #allocation10 [shape = 's32[2]{0}', space=sflag, size = 0x8, scoped, tag = 'scoped memory for tpu_custom_call.1']
    #allocation11 [shape = 'u8[8192]{0}', space=vmem, size = 0x2000, scoped, tag = 'output window, operand 2']
    %15 = vsyncpa [#allocation3], 0
    %s16 = scalar_lea.sflag [#allocation3], 1
    %17 = vsyncpa %s16, 0
    %18 = vsyncpa [#allocation6], 0
    %19 = vsyncpa [#allocation4], 0
    %s20 = scalar_lea.sflag [#allocation4], 1
    %21 = vsyncpa %s20, 0
    %22 = vsyncpa [#allocation10], 0
    %s23 = scalar_lea.sflag [#allocation10], 1
    %24 = vsyncpa %s23, 0
    loop: start=0, step=1, limit=4
    $region2: #{tpu_custom_call.1} parent=1 // loop_pre_header
      _
    $region3: #{tpu_custom_call.1} parent=1 // loop_header
      %s26 = sphi 0, %s30
      %p27 = scmp.ge.s32.totalorder %s26, 4
      %s36 = sphi 0, %s38
      %s39 = sphi 0, %s36
      %s40 = sphi 0, %s39
      %s56 = sphi 0, %s40
      %s60 = sphi 0, %s60
      %s62 = sphi 0, %s60
      %s63 = sphi 0, %s62
      %s77 = sphi 0, %s63
      %s81 = sphi 0, %s81
      %s83 = sphi 0, %s81
      %s84 = sphi 0, %s83
      %s98 = sphi 0, %s84
      %s102 = sphi 0, %s102
      %s104 = sphi 0, %s102
      %s105 = sphi 0, %s104
      %s119 = sphi 0, %s105
      %s123 = sphi 0, %s123
      %s125 = sphi 0, %s123
      %s126 = sphi 0, %s125
      %s140 = sphi 0, %s126
      %s144 = sphi 0, %s144
      %s146 = sphi 0, %s144
      %s147 = sphi 0, %s146
      %s161 = sphi 0, %s147
      %s165 = sphi 0, %s165
      %s167 = sphi 0, %s165
      %s168 = sphi 0, %s167
      %s182 = sphi 0, %s168
      %s188 = sphi 0, %s190
      %s191 = sphi 0, %s188
      %s192 = sphi 0, %s191
      %s208 = sphi 0, %s192
      %s214 = sphi 0, %s216
      %s217 = sphi 0, %s214
      %s218 = sphi 0, %s217
      %s234 = sphi 0, %s218
      %s240 = sphi 0, %s242
      %s243 = sphi 0, %s240
      %s244 = sphi 0, %s243
      %s260 = sphi 0, %s244
    $region4: #{tpu_custom_call.1} parent=1 // loop_header_branch
      %29 = sbr.rel (%p27) target = $region8
    $region5: #{tpu_custom_call.1} parent=1 // loop_body
      %s31 = ssub.s32 %s26, 1
      %s32 = ssub.s32 %s26, 2
      %s33 = sadd.s32 %s26, 1
      %s34 = ssub.s32 %s26, %s33
      %p35 = scmp.eq.s32.totalorder %s34, 0
      %s37 = sadd.s32 %s36, 1
      %s38 = scalar_select %p35, %s36, %s37
      %p41 = pneg %p35
      %p42 = scmp.eq.s32.totalorder %s26, 1
      %p43 = por %p41, %p42
      %p44 = scmp.ne.s32.totalorder %s36, %s39
      %p45 = scmp.eq.s32.totalorder %s26, 0
      %p46 = por %p44, %p45
      %p47 = scmp.ne.s32.totalorder %s36, %s39
      %p48 = scmp.eq.s32.totalorder %s31, 1
      %p49 = por %p47, %p48
      %p50 = scmp.ne.s32.totalorder %s39, %s40
      %p51 = scmp.eq.s32.totalorder %s31, 0
      %p52 = por %p50, %p51
      %p53 = scmp.ne.s32.totalorder %s39, %s40
      %p54 = scmp.eq.s32.totalorder %s32, 1
      %p55 = por %p53, %p54
      %p57 = scmp.ne.s32.totalorder %s40, %s56
      %p58 = scmp.eq.s32.totalorder %s32, 0
      %p59 = por %p57, %p58
      %s61 = sadd.s32 %s60, 1
      %p64 = scmp.eq.s32.totalorder %s26, 1
      %p65 = scmp.ne.s32.totalorder %s60, %s62
      %p66 = scmp.eq.s32.totalorder %s26, 0
      %p67 = por %p65, %p66
      %p68 = scmp.ne.s32.totalorder %s60, %s62
      %p69 = scmp.eq.s32.totalorder %s31, 1
      %p70 = por %p68, %p69
      %p71 = scmp.ne.s32.totalorder %s62, %s63
      %p72 = scmp.eq.s32.totalorder %s31, 0
      %p73 = por %p71, %p72
      %p74 = scmp.ne.s32.totalorder %s62, %s63
      %p75 = scmp.eq.s32.totalorder %s32, 1
      %p76 = por %p74, %p75
      %p78 = scmp.ne.s32.totalorder %s63, %s77
      %p79 = scmp.eq.s32.totalorder %s32, 0
      %p80 = por %p78, %p79
      %s82 = sadd.s32 %s81, 1
      %p85 = scmp.eq.s32.totalorder %s26, 1
      %p86 = scmp.ne.s32.totalorder %s81, %s83
      %p87 = scmp.eq.s32.totalorder %s26, 0
      %p88 = por %p86, %p87
      %p89 = scmp.ne.s32.totalorder %s81, %s83
      %p90 = scmp.eq.s32.totalorder %s31, 1
      %p91 = por %p89, %p90
      %p92 = scmp.ne.s32.totalorder %s83, %s84
      %p93 = scmp.eq.s32.totalorder %s31, 0
      %p94 = por %p92, %p93
      %p95 = scmp.ne.s32.totalorder %s83, %s84
      %p96 = scmp.eq.s32.totalorder %s32, 1
      %p97 = por %p95, %p96
      %p99 = scmp.ne.s32.totalorder %s84, %s98
      %p100 = scmp.eq.s32.totalorder %s32, 0
      %p101 = por %p99, %p100
      %s103 = sadd.s32 %s102, 1
      %p106 = scmp.eq.s32.totalorder %s26, 1
      %p107 = scmp.ne.s32.totalorder %s102, %s104
      %p108 = scmp.eq.s32.totalorder %s26, 0
      %p109 = por %p107, %p108
      %p110 = scmp.ne.s32.totalorder %s102, %s104
      %p111 = scmp.eq.s32.totalorder %s31, 1
      %p112 = por %p110, %p111
      %p113 = scmp.ne.s32.totalorder %s104, %s105
      %p114 = scmp.eq.s32.totalorder %s31, 0
      %p115 = por %p113, %p114
      %p116 = scmp.ne.s32.totalorder %s104, %s105
      %p117 = scmp.eq.s32.totalorder %s32, 1
      %p118 = por %p116, %p117
      %p120 = scmp.ne.s32.totalorder %s105, %s119
      %p121 = scmp.eq.s32.totalorder %s32, 0
      %p122 = por %p120, %p121
      %s124 = sadd.s32 %s123, 1
      %p127 = scmp.eq.s32.totalorder %s26, 1
      %p128 = scmp.ne.s32.totalorder %s123, %s125
      %p129 = scmp.eq.s32.totalorder %s26, 0
      %p130 = por %p128, %p129
      %p131 = scmp.ne.s32.totalorder %s123, %s125
      %p132 = scmp.eq.s32.totalorder %s31, 1
      %p133 = por %p131, %p132
      %p134 = scmp.ne.s32.totalorder %s125, %s126
      %p135 = scmp.eq.s32.totalorder %s31, 0
      %p136 = por %p134, %p135
      %p137 = scmp.ne.s32.totalorder %s125, %s126
      %p138 = scmp.eq.s32.totalorder %s32, 1
      %p139 = por %p137, %p138
      %p141 = scmp.ne.s32.totalorder %s126, %s140
      %p142 = scmp.eq.s32.totalorder %s32, 0
      %p143 = por %p141, %p142
      %s145 = sadd.s32 %s144, 1
      %p148 = scmp.eq.s32.totalorder %s26, 1
      %p149 = scmp.ne.s32.totalorder %s144, %s146
      %p150 = scmp.eq.s32.totalorder %s26, 0
      %p151 = por %p149, %p150
      %p152 = scmp.ne.s32.totalorder %s144, %s146
      %p153 = scmp.eq.s32.totalorder %s31, 1
      %p154 = por %p152, %p153
      %p155 = scmp.ne.s32.totalorder %s146, %s147
      %p156 = scmp.eq.s32.totalorder %s31, 0
      %p157 = por %p155, %p156
      %p158 = scmp.ne.s32.totalorder %s146, %s147
      %p159 = scmp.eq.s32.totalorder %s32, 1
      %p160 = por %p158, %p159
      %p162 = scmp.ne.s32.totalorder %s147, %s161
      %p163 = scmp.eq.s32.totalorder %s32, 0
      %p164 = por %p162, %p163
      %s166 = sadd.s32 %s165, 1
      %p169 = scmp.eq.s32.totalorder %s26, 1
      %p170 = scmp.ne.s32.totalorder %s165, %s167
      %p171 = scmp.eq.s32.totalorder %s26, 0
      %p172 = por %p170, %p171
      %p173 = scmp.ne.s32.totalorder %s165, %s167
      %p174 = scmp.eq.s32.totalorder %s31, 1
      %p175 = por %p173, %p174
      %p176 = scmp.ne.s32.totalorder %s167, %s168
      %p177 = scmp.eq.s32.totalorder %s31, 0
      %p178 = por %p176, %p177
      %p179 = scmp.ne.s32.totalorder %s167, %s168
      %p180 = scmp.eq.s32.totalorder %s32, 1
      %p181 = por %p179, %p180
      %p183 = scmp.ne.s32.totalorder %s168, %s182
      %p184 = scmp.eq.s32.totalorder %s32, 0
      %p185 = por %p183, %p184
      %s186 = ssub.s32 %s26, %s33
      %p187 = scmp.eq.s32.totalorder %s186, 0
      %s189 = sadd.s32 %s188, 1
      %s190 = scalar_select %p187, %s188, %s189
      %p193 = pneg %p187
      %p194 = scmp.eq.s32.totalorder %s26, 1
      %p195 = por %p193, %p194
      %p196 = scmp.ne.s32.totalorder %s188, %s191
      %p197 = scmp.eq.s32.totalorder %s26, 0
      %p198 = por %p196, %p197
      %p199 = scmp.ne.s32.totalorder %s188, %s191
      %p200 = scmp.eq.s32.totalorder %s31, 1
      %p201 = por %p199, %p200
      %p202 = scmp.ne.s32.totalorder %s191, %s192
      %p203 = scmp.eq.s32.totalorder %s31, 0
      %p204 = por %p202, %p203
      %p205 = scmp.ne.s32.totalorder %s191, %s192
      %p206 = scmp.eq.s32.totalorder %s32, 1
      %p207 = por %p205, %p206
      %p209 = scmp.ne.s32.totalorder %s192, %s208
      %p210 = scmp.eq.s32.totalorder %s32, 0
      %p211 = por %p209, %p210
      %s212 = ssub.s32 %s26, %s33
      %p213 = scmp.eq.s32.totalorder %s212, 0
      %s215 = sadd.s32 %s214, 1
      %s216 = scalar_select %p213, %s214, %s215
      %p219 = pneg %p213
      %p220 = scmp.eq.s32.totalorder %s26, 1
      %p221 = por %p219, %p220
      %p222 = scmp.ne.s32.totalorder %s214, %s217
      %p223 = scmp.eq.s32.totalorder %s26, 0
      %p224 = por %p222, %p223
      %p225 = scmp.ne.s32.totalorder %s214, %s217
      %p226 = scmp.eq.s32.totalorder %s31, 1
      %p227 = por %p225, %p226
      %p228 = scmp.ne.s32.totalorder %s217, %s218
      %p229 = scmp.eq.s32.totalorder %s31, 0
      %p230 = por %p228, %p229
      %p231 = scmp.ne.s32.totalorder %s217, %s218
      %p232 = scmp.eq.s32.totalorder %s32, 1
      %p233 = por %p231, %p232
      %p235 = scmp.ne.s32.totalorder %s218, %s234
      %p236 = scmp.eq.s32.totalorder %s32, 0
      %p237 = por %p235, %p236
      %s238 = ssub.s32 %s26, %s33
      %p239 = scmp.eq.s32.totalorder %s238, 0
      %s241 = sadd.s32 %s240, 1
      %s242 = scalar_select %p239, %s240, %s241
      %p245 = pneg %p239
      %p246 = scmp.eq.s32.totalorder %s26, 1
      %p247 = por %p245, %p246
      %p248 = scmp.ne.s32.totalorder %s240, %s243
      %p249 = scmp.eq.s32.totalorder %s26, 0
      %p250 = por %p248, %p249
      %p251 = scmp.ne.s32.totalorder %s240, %s243
      %p252 = scmp.eq.s32.totalorder %s31, 1
      %p253 = por %p251, %p252
      %p254 = scmp.ne.s32.totalorder %s243, %s244
      %p255 = scmp.eq.s32.totalorder %s31, 0
      %p256 = por %p254, %p255
      %p257 = scmp.ne.s32.totalorder %s243, %s244
      %p258 = scmp.eq.s32.totalorder %s32, 1
      %p259 = por %p257, %p258
      %p261 = scmp.ne.s32.totalorder %s244, %s260
      %p262 = scmp.eq.s32.totalorder %s32, 0
      %p263 = por %p261, %p262
      %p264 = scmp.le.s32.totalorder 1, %s26
      %p265 = scmp.lt.s32.totalorder %s26, 3
      %p266 = pnand %p264, %p265
      %p267 = pneg %p266
      // Predicated region
      $region9: #{tpu_custom_call.1} parent=5 // pred_check
        _
      $region10: #{tpu_custom_call.1} parent=5 // pred_check_branch
        %269 = sbr.rel (%p266) target = $region12
      $region11: #{tpu_custom_call.1} parent=5 // pred_region
        %s270 = ssub.s32 %s26, 1
        // Predicated region
        $region13: #{tpu_custom_call.1} parent=11 // pred_check
          %p271 = pneg %p73
        $region14: #{tpu_custom_call.1} parent=11 // pred_check_branch
          %273 = sbr.rel (%p271) target = $region16
        $region15: #{tpu_custom_call.1} parent=11 // pred_region
          %275 = vsyncadd [#allocation6], 0
          %s276 = sshll.u32 %s1, 4
          %s277 = int_to_ptr.hbm [resolvable:$true] %s276
          %s278 = sshll.u32 [#allocation5], 4
          %s279 = int_to_ptr.vmem [resolvable:$true] %s278
          %284 = dma.hbm_to_vmem [thread:$0]  %s277, 512, %s279, [#allocation6], 128, 128, 8
        $region16: #{tpu_custom_call.1} parent=11 // pred_fallthru
          _
        // Predicated region
        $region17: #{tpu_custom_call.1} parent=11 // pred_check
          %p285 = pneg %p94
        $region18: #{tpu_custom_call.1} parent=11 // pred_check_branch
          %287 = sbr.rel (%p285) target = $region20
        $region19: #{tpu_custom_call.1} parent=11 // pred_region
          _
        $region20: #{tpu_custom_call.1} parent=11 // pred_fallthru
          _
        // Predicated region
        $region21: #{tpu_custom_call.1} parent=11 // pred_check
          %p288 = pneg %p115
        $region22: #{tpu_custom_call.1} parent=11 // pred_check_branch
          %290 = sbr.rel (%p288) target = $region24
        $region23: #{tpu_custom_call.1} parent=11 // pred_region
          %292 = vsyncadd [#allocation6], 0
          %s293 = sshll.u32 %s3, 4
          %s294 = int_to_ptr.hbm [resolvable:$true] %s293
          %s295 = sshll.u32 [#allocation7], 4
          %s296 = int_to_ptr.vmem [resolvable:$true] %s295
          %301 = dma.hbm_to_vmem [thread:$0]  %s294, 512, %s296, [#allocation6], 128, 128, 8
        $region24: #{tpu_custom_call.1} parent=11 // pred_fallthru
          _
        // Predicated region
        $region25: #{tpu_custom_call.1} parent=11 // pred_check
          %p302 = pneg %p136
        $region26: #{tpu_custom_call.1} parent=11 // pred_check_branch
          %304 = sbr.rel (%p302) target = $region28
        $region27: #{tpu_custom_call.1} parent=11 // pred_region
          _
        $region28: #{tpu_custom_call.1} parent=11 // pred_fallthru
          _
        // Predicated region
        $region29: #{tpu_custom_call.1} parent=11 // pred_check
          %p305 = pneg %p157
        $region30: #{tpu_custom_call.1} parent=11 // pred_check_branch
          %307 = sbr.rel (%p305) target = $region32
        $region31: #{tpu_custom_call.1} parent=11 // pred_region
          _
        $region32: #{tpu_custom_call.1} parent=11 // pred_fallthru
          _
        // Predicated region
        $region33: #{tpu_custom_call.1} parent=11 // pred_check
          %p308 = pneg %p178
        $region34: #{tpu_custom_call.1} parent=11 // pred_check_branch
          %310 = sbr.rel (%p308) target = $region36
        $region35: #{tpu_custom_call.1} parent=11 // pred_region
          _
        $region36: #{tpu_custom_call.1} parent=11 // pred_fallthru
          _
      $region12: #{tpu_custom_call.1} parent=5 // pred_fallthru
        _
      %p311 = scmp.lt.s32.totalorder %s26, 2
      // Predicated region
      $region37: #{tpu_custom_call.1} parent=5 // pred_check
        %p312 = pneg %p311
      $region38: #{tpu_custom_call.1} parent=5 // pred_check_branch
        %314 = sbr.rel (%p312) target = $region40
      $region39: #{tpu_custom_call.1} parent=5 // pred_region
        // Predicated region
        $region41: #{tpu_custom_call.1} parent=39 // pred_check
          %p315 = pneg %p46
        $region42: #{tpu_custom_call.1} parent=39 // pred_check_branch
          %317 = sbr.rel (%p315) target = $region44
        $region43: #{tpu_custom_call.1} parent=39 // pred_region
          %s318 = sand.u32 %s36, 1
          %s319 = scalar_lea.sflag [#allocation3], %s318
          %s320 = sand.u32 %s36, 1
          %s321 = smul.addr %s320, 8
          %s322 = scalar_lea.vmem [#allocation2], %s321
          %324 = vsyncadd %s319, 0
          %s325 = smul.addr %s26, 8
          %s326 = scalar_lea.hbm %s0, %s325
          %s328 = sshll.u32 %s326, 4
          %s329 = int_to_ptr.hbm [resolvable:$true] %s328
          %s330 = sshll.u32 %s322, 4
          %s331 = int_to_ptr.vmem [resolvable:$true] %s330
          %333 = dma.hbm_to_vmem [thread:$0]  %s329, 128, %s331, %s319
        $region44: #{tpu_custom_call.1} parent=39 // pred_fallthru
          _
      $region40: #{tpu_custom_call.1} parent=5 // pred_fallthru
        _
      %p334 = scmp.le.s32.totalorder 1, %s26
      %p335 = scmp.lt.s32.totalorder %s26, 3
      %p336 = pnand %p334, %p335
      %p337 = pneg %p336
      // Predicated region
      $region45: #{tpu_custom_call.1} parent=5 // pred_check
        _
      $region46: #{tpu_custom_call.1} parent=5 // pred_check_branch
        %339 = sbr.rel (%p336) target = $region48
      $region47: #{tpu_custom_call.1} parent=5 // pred_region
        %s340 = ssub.s32 %s26, 1
        %s341 = sand.u32 %s39, 1
        %s342 = scalar_lea.sflag [#allocation3], %s341
        %s343 = sand.u32 %s39, 1
        %s344 = smul.addr %s343, 8
        %s345 = scalar_lea.vmem [#allocation2], %s344
        // Predicated region
        $region49: #{tpu_custom_call.1} parent=47 // pred_check
          %p346 = pneg %p52
        $region50: #{tpu_custom_call.1} parent=47 // pred_check_branch
          %348 = sbr.rel (%p346) target = $region52
        $region51: #{tpu_custom_call.1} parent=47 // pred_region
          %350 = dma.done %s342, 128
        $region52: #{tpu_custom_call.1} parent=47 // pred_fallthru
          _
        // Predicated region
        $region53: #{tpu_custom_call.1} parent=47 // pred_check
          %p351 = pneg %p73
        $region54: #{tpu_custom_call.1} parent=47 // pred_check_branch
          %353 = sbr.rel (%p351) target = $region56
        $region55: #{tpu_custom_call.1} parent=47 // pred_region
          %355 = dma.done [#allocation6], 512
        $region56: #{tpu_custom_call.1} parent=47 // pred_fallthru
          _
        // Predicated region
        $region57: #{tpu_custom_call.1} parent=47 // pred_check
          %p356 = pneg %p115
        $region58: #{tpu_custom_call.1} parent=47 // pred_check_branch
          %358 = sbr.rel (%p356) target = $region60
        $region59: #{tpu_custom_call.1} parent=47 // pred_region
          %360 = dma.done [#allocation6], 512
        $region60: #{tpu_custom_call.1} parent=47 // pred_fallthru
          _
        %s361 = sand.u32 %s39, 1
        %s362 = scalar_lea.sflag [#allocation3], %s361
        %s363 = sand.u32 %s39, 1
        %s364 = smul.addr %s363, 8
        %s365 = scalar_lea.vmem [#allocation2], %s364
        %p366 = pneg %p52
        %p367 = pneg %p49
        %p368 = pneg %p73
        %p369 = pneg %p70
        %p370 = pneg %p94
        %p371 = pneg %p91
        %p372 = pneg %p115
        %p373 = pneg %p112
        %p374 = pneg %p136
        %p375 = pneg %p133
        %p376 = pneg %p157
        %p377 = pneg %p154
        %p378 = pneg %p178
        %p379 = pneg %p175
        %p380 = pneg %p204
        %p381 = pneg %p201
        %s382 = sand.u32 %s191, 1
        %s383 = scalar_lea.sflag [#allocation4], %s382
        %s384 = sand.u32 %s191, 1
        %s385 = smul.addr %s384, 8
        %s386 = scalar_lea.vmem [#allocation8], %s385
        %p387 = pneg %p230
        %p388 = pneg %p227
        %s389 = sand.u32 %s31, 1
        %s390 = scalar_lea.sflag [#allocation10], %s389
        %s391 = sand.u32 %s217, 1
        %s392 = smul.addr %s391, 8
        %s393 = scalar_lea.vmem [#allocation9], %s392
        %p394 = pneg %p256
        %p395 = pneg %p253
        %s396 = sand.u32 %s31, 1
        %s397 = scalar_lea.sflag [#allocation10], %s396
        %s398 = sand.u32 %s243, 1
        %s399 = smul.addr %s398, 8
        %s400 = scalar_lea.vmem [#allocation11], %s399
        %v401 = vld [vmem:[%s345] sm:$0xff]
        %v402 = vld [vmem:[#allocation5] sm:$0xff]
        %v403 = vld [vmem:[#allocation5 + $0x8] sm:$0xff]
        %v404 = vld [vmem:[#allocation5 + $0x10] sm:$0xff]
        %v405 = vld [vmem:[#allocation5 + $0x18] sm:$0xff]
        %v406 = vld [vmem:[%s2] sm:$0x1]
        %v408 = vperm.slane %v406, 0
        %vm410 = vcmask 261120
        %v412 = vsel %vm410, %v401, 0
        %414 = vmatpush.msra.mxu0 0.0
        %415 = vmatpush.msra.mxu0 0.0
        %416 = vmatpush.msra.mxu0 0.0
        %417 = vmatpush.msra.mxu0 0.0
        %418 = vmatpush.msra.mxu0 0.0
        %419 = vmatpush.msra.mxu0 0.0
        %420 = vmatpush.msra.mxu0 0.0
        %421 = vmatpush.msra.mxu0 0.0
        %422 = vmatpush.msra.mxu0 0.0
        %423 = vmatpush.msra.mxu0 0.0
        %424 = vmatpush.msra.mxu0 0.0
        %425 = vmatpush.msra.mxu0 0.0
        %426 = vmatpush.msra.mxu0 %v405
        %427 = vmatpush.msra.mxu0 %v404
        %428 = vmatpush.msra.mxu0 %v403
        %429 = vmatpush.msra.mxu0 %v402
        %430 = vmatmul.f32.gmra.mxu0 %v412
        %v431 = vpop.f32.mrf.mxu0
        %v432 = vadd.f32 %v408, %v431
        %433 = vdwg.mxu0
        %435 = vrot.lane.b32.xlu0 %v432, 96
        %v436 = vpop.permute.xlu0 %435
        %438 = vst.msk [vmem:[%s393] sm:$0xff] %vm410, %v436
        %439 = vrot.lane.b32.xlu0 %v432, 64
        %v440 = vpop.permute.xlu0 %439
        %442 = vst.msk [vmem:[%s400] sm:$0xff] %vm410, %v440
        %v443 = vlaneseq
        %v444 = vshrl.u32 %v443, 7
        %v445 = vlaneseq
        %v446 = vand.u32 %v445, 127
        %vm447 = vcmp.gt.s32.totalorder %v446, %v444
        %v448 = vsel %vm447, -1e+30, 0.0
        %v449 = vld [vmem:[#allocation7] sm:$0xff]
        %v450 = vld [vmem:[#allocation7 + $0x8] sm:$0xff]
        %v451 = vld [vmem:[#allocation7 + $0x10] sm:$0xff]
        %v452 = vld [vmem:[#allocation7 + $0x18] sm:$0xff]
        %vm453 = vcmask 64512
        %v454 = vsel %vm453, %v432, 0
        %v456 = vsel %vm453, %v436, 0
        %458 = vmatpush.xpose.msra.mxu0 0.0
        %459 = vmatpush.xpose.msra.mxu0 0.0
        %460 = vmatpush.xpose.msra.mxu0 0.0
        %461 = vmatpush.xpose.msra.mxu0 0.0
        %462 = vmatpush.xpose.msra.mxu0 0.0
        %463 = vmatpush.xpose.msra.mxu0 0.0
        %464 = vmatpush.xpose.msra.mxu0 0.0
        %465 = vmatpush.xpose.msra.mxu0 0.0
        %466 = vmatpush.xpose.msra.mxu0 0.0
        %467 = vmatpush.xpose.msra.mxu0 0.0
        %468 = vmatpush.xpose.msra.mxu0 0.0
        %469 = vmatpush.xpose.msra.mxu0 0.0
        %470 = vmatpush.xpose.msra.mxu0 0.0
        %471 = vmatpush.xpose.msra.mxu0 0.0
        %472 = vmatpush.xpose.msra.mxu0 0.0
        %473 = vmatpush.xpose.msra.mxu0 %v456
        %474 = vmatmul.f32.gmra.mxu0 %v454
        %v475 = vpop.f32.mrf.mxu0
        %v476 = vadd.f32 %v448, %v475
        %477 = vdwg.mxu0
        %v478 = vsel %vm453, %v476, -inf
        %479 = vmax.xlane.f32.xlu0 %v478
        %v480 = vpop.xlane.xlu0 %479
        %v481 = vsub.f32 %v476, %v480
        %v482 = vmul.f32 %v481, 1.442695
        %v483 = vpow.pop %v482
        %v484 = vsel %vm453, %v483, 0.0
        %485 = vadd.xlane.f32.xlu0 %v484
        %v486 = vpop.xlane.xlu0 %485
        %v487 = vrcp.pop %v486
        %v488 = vmul.f32 %v483, %v487
        %v490 = vsel %vm453, %v488, 0
        %492 = vmatpush.msra.mxu0 0.0
        %493 = vmatpush.msra.mxu0 0.0
        %494 = vmatpush.msra.mxu0 0.0
        %495 = vmatpush.msra.mxu0 0.0
        %496 = vmatpush.msra.mxu0 0.0
        %497 = vmatpush.msra.mxu0 0.0
        %498 = vmatpush.msra.mxu0 0.0
        %499 = vmatpush.msra.mxu0 0.0
        %500 = vmatpush.msra.mxu0 0.0
        %501 = vmatpush.msra.mxu0 0.0
        %502 = vmatpush.msra.mxu0 0.0
        %503 = vmatpush.msra.mxu0 0.0
        %504 = vmatpush.msra.mxu0 0.0
        %505 = vmatpush.msra.mxu0 0.0
        %506 = vmatpush.msra.mxu0 0.0
        %507 = vmatpush.msra.mxu0 %v440
        %508 = vmatmul.f32.gmra.mxu0 %v490
        %v509 = vpop.f32.mrf.mxu0
        %v510 = vadd.f32 0.0, %v509
        %511 = vdwg.mxu0
        %512 = vrot.lane.b32.xlu0 %v432, 120
        %v513 = vpop.permute.xlu0 %512
        %514 = vrot.lane.b32.xlu0 %v432, 88
        %v515 = vpop.permute.xlu0 %514
        %v516 = vsel %vm453, %v513, 0
        %v518 = vsel %vm453, %v515, 0
        %520 = vmatpush.xpose.msra.mxu0 0.0
        %521 = vmatpush.xpose.msra.mxu0 0.0
        %522 = vmatpush.xpose.msra.mxu0 0.0
        %523 = vmatpush.xpose.msra.mxu0 0.0
        %524 = vmatpush.xpose.msra.mxu0 0.0
        %525 = vmatpush.xpose.msra.mxu0 0.0
        %526 = vmatpush.xpose.msra.mxu0 0.0
        %527 = vmatpush.xpose.msra.mxu0 0.0
        %528 = vmatpush.xpose.msra.mxu0 0.0
        %529 = vmatpush.xpose.msra.mxu0 0.0
        %530 = vmatpush.xpose.msra.mxu0 0.0
        %531 = vmatpush.xpose.msra.mxu0 0.0
        %532 = vmatpush.xpose.msra.mxu0 0.0
        %533 = vmatpush.xpose.msra.mxu0 0.0
        %534 = vmatpush.xpose.msra.mxu0 0.0
        %535 = vmatpush.xpose.msra.mxu0 %v518
        %536 = vmatmul.f32.gmra.mxu0 %v516
        %v537 = vpop.f32.mrf.mxu0
        %v538 = vadd.f32 %v448, %v537
        %539 = vdwg.mxu0
        %v540 = vsel %vm453, %v538, -inf
        %541 = vmax.xlane.f32.xlu0 %v540
        %v542 = vpop.xlane.xlu0 %541
        %v543 = vsub.f32 %v538, %v542
        %v544 = vmul.f32 %v543, 1.442695
        %v545 = vpow.pop %v544
        %v546 = vsel %vm453, %v545, 0.0
        %547 = vadd.xlane.f32.xlu0 %v546
        %v548 = vpop.xlane.xlu0 %547
        %v549 = vrcp.pop %v548
        %v550 = vmul.f32 %v545, %v549
        %551 = vrot.lane.b32.xlu0 %v432, 56
        %v552 = vpop.permute.xlu0 %551
        %v555 = vsel %vm453, %v550, 0
        %557 = vmatpush.msra.mxu0 0.0
        %558 = vmatpush.msra.mxu0 0.0
        %559 = vmatpush.msra.mxu0 0.0
        %560 = vmatpush.msra.mxu0 0.0
        %561 = vmatpush.msra.mxu0 0.0
        %562 = vmatpush.msra.mxu0 0.0
        %563 = vmatpush.msra.mxu0 0.0
        %564 = vmatpush.msra.mxu0 0.0
        %565 = vmatpush.msra.mxu0 0.0
        %566 = vmatpush.msra.mxu0 0.0
        %567 = vmatpush.msra.mxu0 0.0
        %568 = vmatpush.msra.mxu0 0.0
        %569 = vmatpush.msra.mxu0 0.0
        %570 = vmatpush.msra.mxu0 0.0
        %571 = vmatpush.msra.mxu0 0.0
        %572 = vmatpush.msra.mxu0 %v552
        %573 = vmatmul.f32.gmra.mxu0 %v555
        %v574 = vpop.f32.mrf.mxu0
        %v575 = vadd.f32 0.0, %v574
        %576 = vdwg.mxu0
        %v578 = vsel %vm453, %v575, 0
        %580 = vmatpush.msra.mxu0 0.0
        %581 = vmatpush.msra.mxu0 0.0
        %582 = vmatpush.msra.mxu0 0.0
        %583 = vmatpush.msra.mxu0 0.0
        %584 = vmatpush.msra.mxu0 0.0
        %585 = vmatpush.msra.mxu0 0.0
        %586 = vmatpush.msra.mxu0 0.0
        %587 = vmatpush.msra.mxu0 0.0
        %588 = vmatpush.msra.mxu0 0.0
        %589 = vmatpush.msra.mxu0 0.0
        %590 = vmatpush.msra.mxu0 0.0
        %591 = vmatpush.msra.mxu0 0.0
        %592 = vmatpush.msra.mxu0 0.0
        %593 = vmatpush.msra.mxu0 0.0
        %594 = vmatpush.msra.mxu0 0.0
        %595 = vmatpush.msra.mxu0 %v450
        %596 = vmatmul.f32.gmra.mxu0 %v578
        %v597 = vpop.f32.mrf.mxu0
        %v598 = vadd.f32 0.0, %v597
        %599 = vdwg.mxu0
        %v601 = vsel %vm453, %v510, 0
        %603 = vmatpush.msra.mxu0 0.0
        %604 = vmatpush.msra.mxu0 0.0
        %605 = vmatpush.msra.mxu0 0.0
        %606 = vmatpush.msra.mxu0 0.0
        %607 = vmatpush.msra.mxu0 0.0
        %608 = vmatpush.msra.mxu0 0.0
        %609 = vmatpush.msra.mxu0 0.0
        %610 = vmatpush.msra.mxu0 0.0
        %611 = vmatpush.msra.mxu0 0.0
        %612 = vmatpush.msra.mxu0 0.0
        %613 = vmatpush.msra.mxu0 0.0
        %614 = vmatpush.msra.mxu0 0.0
        %615 = vmatpush.msra.mxu0 0.0
        %616 = vmatpush.msra.mxu0 0.0
        %617 = vmatpush.msra.mxu0 0.0
        %618 = vmatpush.msra.mxu0 %v449
        %619 = vmatmul.f32.gmra.mxu0 %v601
        %v620 = vpop.f32.mrf.mxu0
        %v621 = vadd.f32 %v598, %v620
        %622 = vdwg.mxu0
        %623 = vrot.lane.b32.xlu0 %v432, 112
        %v624 = vpop.permute.xlu0 %623
        %625 = vrot.lane.b32.xlu0 %v432, 80
        %v626 = vpop.permute.xlu0 %625
        %v627 = vsel %vm453, %v624, 0
        %v629 = vsel %vm453, %v626, 0
        %631 = vmatpush.xpose.msra.mxu0 0.0
        %632 = vmatpush.xpose.msra.mxu0 0.0
        %633 = vmatpush.xpose.msra.mxu0 0.0
        %634 = vmatpush.xpose.msra.mxu0 0.0
        %635 = vmatpush.xpose.msra.mxu0 0.0
        %636 = vmatpush.xpose.msra.mxu0 0.0
        %637 = vmatpush.xpose.msra.mxu0 0.0
        %638 = vmatpush.xpose.msra.mxu0 0.0
        %639 = vmatpush.xpose.msra.mxu0 0.0
        %640 = vmatpush.xpose.msra.mxu0 0.0
        %641 = vmatpush.xpose.msra.mxu0 0.0
        %642 = vmatpush.xpose.msra.mxu0 0.0
        %643 = vmatpush.xpose.msra.mxu0 0.0
        %644 = vmatpush.xpose.msra.mxu0 0.0
        %645 = vmatpush.xpose.msra.mxu0 0.0
        %646 = vmatpush.xpose.msra.mxu0 %v629
        %647 = vmatmul.f32.gmra.mxu0 %v627
        %v648 = vpop.f32.mrf.mxu0
        %v649 = vadd.f32 %v448, %v648
        %650 = vdwg.mxu0
        %v651 = vsel %vm453, %v649, -inf
        %652 = vmax.xlane.f32.xlu0 %v651
        %v653 = vpop.xlane.xlu0 %652
        %v654 = vsub.f32 %v649, %v653
        %v655 = vmul.f32 %v654, 1.442695
        %v656 = vpow.pop %v655
        %v657 = vsel %vm453, %v656, 0.0
        %658 = vadd.xlane.f32.xlu0 %v657
        %v659 = vpop.xlane.xlu0 %658
        %v660 = vrcp.pop %v659
        %v661 = vmul.f32 %v656, %v660
        %662 = vrot.lane.b32.xlu0 %v432, 48
        %v663 = vpop.permute.xlu0 %662
        %v666 = vsel %vm453, %v661, 0
        %668 = vmatpush.msra.mxu0 0.0
        %669 = vmatpush.msra.mxu0 0.0
        %670 = vmatpush.msra.mxu0 0.0
        %671 = vmatpush.msra.mxu0 0.0
        %672 = vmatpush.msra.mxu0 0.0
        %673 = vmatpush.msra.mxu0 0.0
        %674 = vmatpush.msra.mxu0 0.0
        %675 = vmatpush.msra.mxu0 0.0
        %676 = vmatpush.msra.mxu0 0.0
        %677 = vmatpush.msra.mxu0 0.0
        %678 = vmatpush.msra.mxu0 0.0
        %679 = vmatpush.msra.mxu0 0.0
        %680 = vmatpush.msra.mxu0 0.0
        %681 = vmatpush.msra.mxu0 0.0
        %682 = vmatpush.msra.mxu0 0.0
        %683 = vmatpush.msra.mxu0 %v663
        %684 = vmatmul.f32.gmra.mxu0 %v666
        %v685 = vpop.f32.mrf.mxu0
        %v686 = vadd.f32 0.0, %v685
        %687 = vdwg.mxu0
        %v689 = vsel %vm453, %v686, 0
        %691 = vmatpush.msra.mxu0 0.0
        %692 = vmatpush.msra.mxu0 0.0
        %693 = vmatpush.msra.mxu0 0.0
        %694 = vmatpush.msra.mxu0 0.0
        %695 = vmatpush.msra.mxu0 0.0
        %696 = vmatpush.msra.mxu0 0.0
        %697 = vmatpush.msra.mxu0 0.0
        %698 = vmatpush.msra.mxu0 0.0
        %699 = vmatpush.msra.mxu0 0.0
        %700 = vmatpush.msra.mxu0 0.0
        %701 = vmatpush.msra.mxu0 0.0
        %702 = vmatpush.msra.mxu0 0.0
        %703 = vmatpush.msra.mxu0 0.0
        %704 = vmatpush.msra.mxu0 0.0
        %705 = vmatpush.msra.mxu0 0.0
        %706 = vmatpush.msra.mxu0 %v451
        %707 = vmatmul.f32.gmra.mxu0 %v689
        %v708 = vpop.f32.mrf.mxu0
        %v709 = vadd.f32 0.0, %v708
        %710 = vdwg.mxu0
        %v711 = vadd.f32 %v621, %v709
        %712 = vrot.lane.b32.xlu0 %v432, 104
        %v713 = vpop.permute.xlu0 %712
        %714 = vrot.lane.b32.xlu0 %v432, 72
        %v715 = vpop.permute.xlu0 %714
        %v716 = vsel %vm453, %v713, 0
        %v718 = vsel %vm453, %v715, 0
        %720 = vmatpush.xpose.msra.mxu0 0.0
        %721 = vmatpush.xpose.msra.mxu0 0.0
        %722 = vmatpush.xpose.msra.mxu0 0.0
        %723 = vmatpush.xpose.msra.mxu0 0.0
        %724 = vmatpush.xpose.msra.mxu0 0.0
        %725 = vmatpush.xpose.msra.mxu0 0.0
        %726 = vmatpush.xpose.msra.mxu0 0.0
        %727 = vmatpush.xpose.msra.mxu0 0.0
        %728 = vmatpush.xpose.msra.mxu0 0.0
        %729 = vmatpush.xpose.msra.mxu0 0.0
        %730 = vmatpush.xpose.msra.mxu0 0.0
        %731 = vmatpush.xpose.msra.mxu0 0.0
        %732 = vmatpush.xpose.msra.mxu0 0.0
        %733 = vmatpush.xpose.msra.mxu0 0.0
        %734 = vmatpush.xpose.msra.mxu0 0.0
        %735 = vmatpush.xpose.msra.mxu0 %v718
        %736 = vmatmul.f32.gmra.mxu0 %v716
        %v737 = vpop.f32.mrf.mxu0
        %v738 = vadd.f32 %v448, %v737
        %739 = vdwg.mxu0
        %v740 = vsel %vm453, %v738, -inf
        %741 = vmax.xlane.f32.xlu0 %v740
        %v742 = vpop.xlane.xlu0 %741
        %v743 = vsub.f32 %v738, %v742
        %v744 = vmul.f32 %v743, 1.442695
        %v745 = vpow.pop %v744
        %v746 = vsel %vm453, %v745, 0.0
        %747 = vadd.xlane.f32.xlu0 %v746
        %v748 = vpop.xlane.xlu0 %747
        %v749 = vrcp.pop %v748
        %v750 = vmul.f32 %v745, %v749
        %751 = vrot.lane.b32.xlu0 %v432, 40
        %v752 = vpop.permute.xlu0 %751
        %v755 = vsel %vm453, %v750, 0
        %757 = vmatpush.msra.mxu0 0.0
        %758 = vmatpush.msra.mxu0 0.0
        %759 = vmatpush.msra.mxu0 0.0
        %760 = vmatpush.msra.mxu0 0.0
        %761 = vmatpush.msra.mxu0 0.0
        %762 = vmatpush.msra.mxu0 0.0
        %763 = vmatpush.msra.mxu0 0.0
        %764 = vmatpush.msra.mxu0 0.0
        %765 = vmatpush.msra.mxu0 0.0
        %766 = vmatpush.msra.mxu0 0.0
        %767 = vmatpush.msra.mxu0 0.0
        %768 = vmatpush.msra.mxu0 0.0
        %769 = vmatpush.msra.mxu0 0.0
        %770 = vmatpush.msra.mxu0 0.0
        %771 = vmatpush.msra.mxu0 0.0
        %772 = vmatpush.msra.mxu0 %v752
        %773 = vmatmul.f32.gmra.mxu0 %v755
        %v774 = vpop.f32.mrf.mxu0
        %v775 = vadd.f32 0.0, %v774
        %776 = vdwg.mxu0
        %v778 = vsel %vm453, %v775, 0
        %780 = vmatpush.msra.mxu0 0.0
        %781 = vmatpush.msra.mxu0 0.0
        %782 = vmatpush.msra.mxu0 0.0
        %783 = vmatpush.msra.mxu0 0.0
        %784 = vmatpush.msra.mxu0 0.0
        %785 = vmatpush.msra.mxu0 0.0
        %786 = vmatpush.msra.mxu0 0.0
        %787 = vmatpush.msra.mxu0 0.0
        %788 = vmatpush.msra.mxu0 0.0
        %789 = vmatpush.msra.mxu0 0.0
        %790 = vmatpush.msra.mxu0 0.0
        %791 = vmatpush.msra.mxu0 0.0
        %792 = vmatpush.msra.mxu0 0.0
        %793 = vmatpush.msra.mxu0 0.0
        %794 = vmatpush.msra.mxu0 0.0
        %795 = vmatpush.msra.mxu0 %v452
        %796 = vmatmul.f32.gmra.mxu0 %v778
        %v797 = vpop.f32.mrf.mxu0
        %v798 = vadd.f32 0.0, %v797
        %799 = vdwg.mxu0
        %v800 = vadd.f32 %v711, %v798
        %v801 = vld [vmem:[%s4] sm:$0x1]
        %v803 = vperm.slane %v801, 0
        %v805 = vadd.f32 %v800, %v803
        %v806 = vadd.f32 %v401, %v805
        %v807 = vsel %vm410, %v806, 0.0
        %808 = vadd.xlane.f32.xlu0 %v807
        %v809 = vpop.xlane.xlu0 %808
        %v810 = vrcp.pop 32.0
        %v811 = vmul.f32 32.0, %v810
        %v812 = vsub.f32 1.0, %v811
        %v813 = vmul.f32 %v810, %v812
        %v814 = vadd.f32 %v810, %v813
        %vm815 = vweird.f32 %v810
        %v816 = vsel %vm815, %v810, %v814
        %v817 = vmul.f32 %v809, %v816
        %v818 = vsub.f32 %v806, %v817
        %v819 = vmul.f32 %v818, %v818
        %v820 = vsel %vm410, %v819, 0.0
        %821 = vadd.xlane.f32.xlu0 %v820
        %v822 = vpop.xlane.xlu0 %821
        %v823 = vmul.f32 %v822, %v816
        %v824 = vadd.f32 %v823, 1e-05
        %v825 = vrsqrt.pop %v824
        %v826 = vmul.f32 %v825, %v824
        %v827 = vmul.f32 %v826, %v825
        %v828 = vmul.f32 0.5, %v827
        %v829 = vsub.f32 1.5, %v828
        %v830 = vmul.f32 %v825, %v829
        %vm831 = vweird.f32 %v824
        %vm832 = vweird.f32 %v825
        %vm833 = vmor %vm831, %vm832
        %v834 = vsel %vm833, %v825, %v830
        %v835 = vmul.f32 %v818, %v834
        %v836 = vld [vmem:[%s5] sm:$0x1]
        %v838 = vperm.slane %v836, 0
        %v840 = vmul.f32 %v835, %v838
        %v841 = vld [vmem:[%s6] sm:$0x1]
        %v843 = vperm.slane %v841, 0
        %v845 = vadd.f32 %v840, %v843
        %846 = vst.msk [vmem:[%s386] sm:$0xff] %vm410, %v845
        %s847 = sand.u32 %s191, 1
        %s848 = scalar_lea.sflag [#allocation4], %s847
        %s849 = sand.u32 %s191, 1
        %s850 = smul.addr %s849, 8
        %s851 = scalar_lea.vmem [#allocation8], %s850
        %s852 = sand.u32 %s31, 1
        %s853 = scalar_lea.sflag [#allocation10], %s852
        %s854 = sand.u32 %s217, 1
        %s855 = smul.addr %s854, 8
        %s856 = scalar_lea.vmem [#allocation9], %s855
        %s857 = sand.u32 %s31, 1
        %s858 = scalar_lea.sflag [#allocation10], %s857
        %s859 = sand.u32 %s243, 1
        %s860 = smul.addr %s859, 8
        %s861 = scalar_lea.vmem [#allocation11], %s860
        // Predicated region
        $region61: #{tpu_custom_call.1} parent=47 // pred_check
          %p862 = pneg %p201
        $region62: #{tpu_custom_call.1} parent=47 // pred_check_branch
          %864 = sbr.rel (%p862) target = $region64
        $region63: #{tpu_custom_call.1} parent=47 // pred_region
          %866 = vsyncadd %s848, 0
          %s867 = smul.addr %s31, 8
          %s868 = scalar_lea.hbm %s7, %s867
          %s870 = sshll.u32 %s851, 4
          %s871 = int_to_ptr.vmem [resolvable:$true] %s870
          %s872 = sshll.u32 %s868, 4
          %s873 = int_to_ptr.hbm [resolvable:$true] %s872
          %875 = dma.vmem_to_hbm [thread:$0]  %s871, 128, %s873, %s848
        $region64: #{tpu_custom_call.1} parent=47 // pred_fallthru
          _
        // Predicated region
        $region65: #{tpu_custom_call.1} parent=47 // pred_check
          %p876 = pneg %p227
        $region66: #{tpu_custom_call.1} parent=47 // pred_check_branch
          %878 = sbr.rel (%p876) target = $region68
        $region67: #{tpu_custom_call.1} parent=47 // pred_region
          %880 = vsyncadd %s853, 0
          %s881 = smul.addr %s31, 8
          %s882 = scalar_lea.hbm %s8, %s881
          %s884 = sshll.u32 %s856, 4
          %s885 = int_to_ptr.vmem [resolvable:$true] %s884
          %s886 = sshll.u32 %s882, 4
          %s887 = int_to_ptr.hbm [resolvable:$true] %s886
          %889 = dma.vmem_to_hbm [thread:$0]  %s885, 128, %s887, %s853
        $region68: #{tpu_custom_call.1} parent=47 // pred_fallthru
          _
        // Predicated region
        $region69: #{tpu_custom_call.1} parent=47 // pred_check
          %p890 = pneg %p253
        $region70: #{tpu_custom_call.1} parent=47 // pred_check_branch
          %892 = sbr.rel (%p890) target = $region72
        $region71: #{tpu_custom_call.1} parent=47 // pred_region
          %894 = vsyncadd %s858, 0
          %s895 = smul.addr %s31, 8
          %s896 = scalar_lea.hbm %s9, %s895
          %s898 = sshll.u32 %s861, 4
          %s899 = int_to_ptr.vmem [resolvable:$true] %s898
          %s900 = sshll.u32 %s896, 4
          %s901 = int_to_ptr.hbm [resolvable:$true] %s900
          %903 = dma.vmem_to_hbm [thread:$0]  %s899, 128, %s901, %s858
        $region72: #{tpu_custom_call.1} parent=47 // pred_fallthru
          _
      $region48: #{tpu_custom_call.1} parent=5 // pred_fallthru
        _
      %p904 = scmp.le.s32.totalorder 2, %s26
      // Predicated region
      $region73: #{tpu_custom_call.1} parent=5 // pred_check
        %p905 = pneg %p904
      $region74: #{tpu_custom_call.1} parent=5 // pred_check_branch
        %907 = sbr.rel (%p905) target = $region76
      $region75: #{tpu_custom_call.1} parent=5 // pred_region
        %s908 = ssub.s32 %s26, 2
        // Predicated region
        $region77: #{tpu_custom_call.1} parent=75 // pred_check
          %p909 = pneg %p207
        $region78: #{tpu_custom_call.1} parent=75 // pred_check_branch
          %911 = sbr.rel (%p909) target = $region80
        $region79: #{tpu_custom_call.1} parent=75 // pred_region
          %s912 = sand.u32 %s192, 1
          %s913 = scalar_lea.sflag [#allocation4], %s912
          %s914 = sand.u32 %s192, 1
          %s915 = smul.addr %s914, 8
          %s916 = scalar_lea.vmem [#allocation8], %s915
          %918 = dma.done %s913, 128
        $region80: #{tpu_custom_call.1} parent=75 // pred_fallthru
          _
        // Predicated region
        $region81: #{tpu_custom_call.1} parent=75 // pred_check
          %p919 = pneg %p233
        $region82: #{tpu_custom_call.1} parent=75 // pred_check_branch
          %921 = sbr.rel (%p919) target = $region84
        $region83: #{tpu_custom_call.1} parent=75 // pred_region
          %s922 = sand.u32 %s32, 1
          %s923 = scalar_lea.sflag [#allocation10], %s922
          %s924 = sand.u32 %s218, 1
          %s925 = smul.addr %s924, 8
          %s926 = scalar_lea.vmem [#allocation9], %s925
          %928 = dma.done %s923, 128
        $region84: #{tpu_custom_call.1} parent=75 // pred_fallthru
          _
        // Predicated region
        $region85: #{tpu_custom_call.1} parent=75 // pred_check
          %p929 = pneg %p259
        $region86: #{tpu_custom_call.1} parent=75 // pred_check_branch
          %931 = sbr.rel (%p929) target = $region88
        $region87: #{tpu_custom_call.1} parent=75 // pred_region
          %s932 = sand.u32 %s32, 1
          %s933 = scalar_lea.sflag [#allocation10], %s932
          %s934 = sand.u32 %s244, 1
          %s935 = smul.addr %s934, 8
          %s936 = scalar_lea.vmem [#allocation11], %s935
          %938 = dma.done %s933, 128
        $region88: #{tpu_custom_call.1} parent=75 // pred_fallthru
          _
      $region76: #{tpu_custom_call.1} parent=5 // pred_fallthru
        _
    $region6: #{tpu_custom_call.1} parent=1 // loop_footer
      %s30 = sadd.s32 1, %s26
    $region7: #{tpu_custom_call.1} parent=1 // loop_footer_branch
      %25 = sbr.rel target = $region3
    $region8: #{tpu_custom_call.1} parent=1 // loop_exit
      _
    %939 = vsyncpa [#allocation3], 1
    %s940 = scalar_lea.sflag [#allocation3], 1
    %941 = vsyncpa %s940, 1
    %942 = vsyncpa [#allocation6], 1
    %943 = vsyncpa [#allocation4], 1
    %s944 = scalar_lea.sflag [#allocation4], 1
    %945 = vsyncpa %s944, 1
    %946 = vsyncpa [#allocation10], 1
    %s947 = scalar_lea.sflag [#allocation10], 1
    %948 = vsyncpa %s947, 1

</llo_original>
